<compile_context>
chip_gen: v5e
topology: v5e:2x2
jax: 0.10.0
libtpu: 0.0.40
codegen_flags: <defaults>
</compile_context>

<pallas_src>
import jax
import jax.numpy as jnp
from jax.experimental import pallas as pl
from jax.experimental.pallas import tpu as pltpu

_PAD = 128  # lane-dense padded feature width (must be >= hid+2 and out_f+2)


def _gat2_fused_kernel(x_ref, a_ref, w1_ref, b1_ref, w2_ref, b2_ref, o_ref):
    """Fused 2-layer single-head dense GAT. All operands VMEM-resident.

    Projection weights are pre-augmented in the wrapper: columns [0, F_out)
    hold W (zero-padded to 128 lanes), column _PAD-2 holds W @ a_src^T and
    column _PAD-1 holds W @ a_dst^T, so h_aug = x @ W_aug carries both the
    projected features and the per-node attention scores.
    """
    x = x_ref[...]                                        # (N, F_in) f32
    mask = a_ref[...] > 0                                 # (N, N) bool, reused by both layers
    neg_big = jnp.float32(-1e30)

    def attention_layer(h_aug, bias):
        # h_aug: (N, _PAD) f32; last two lanes are the src/dst scores.
        s_src = h_aug[:, _PAD - 2:_PAD - 1]               # (N, 1)
        s_dst = h_aug[:, _PAD - 1:_PAD]                   # (N, 1)
        e = s_src + jnp.transpose(s_dst)                  # (N, N)
        e = jnp.maximum(e, 0.2 * e)                       # LeakyReLU(0.2)
        e = jnp.where(mask, e, neg_big)                   # mask non-edges
        e_max = jnp.max(e, axis=-1, keepdims=True)
        p = jnp.exp(e - e_max)                            # masked entries underflow to 0
        denom = jnp.sum(p, axis=-1, keepdims=True)        # >= 1 whenever the row has an edge
        attn = p * pl.reciprocal(denom, approx=True)      # EUP vrcp slot
        # Neighbor aggregation on the MXU: bf16 operands, f32 accumulation.
        out = jnp.dot(attn.astype(jnp.bfloat16),
                      h_aug.astype(jnp.bfloat16),
                      preferred_element_type=jnp.float32)  # (N, _PAD)
        return out + bias

    # ---- layer 1: conv1(x, A).relu() -------------------------------------
    h1 = jnp.dot(x, w1_ref[...], preferred_element_type=jnp.float32)     # (N, _PAD)
    z1 = jnp.maximum(attention_layer(h1, b1_ref[...]), 0.0)              # fused ReLU

    # ---- layer 2: conv2(z1, A) --------------------------------------------
    # (padded rows/cols of W2_aug are zero, so junk living in z1's padding /
    #  score lanes never reaches the real output columns)
    h2 = jnp.dot(z1, w2_ref[...], preferred_element_type=jnp.float32)    # (N, _PAD)
    out = attention_layer(h2, b2_ref[...])

    o_ref[...] = out.astype(o_ref.dtype)


def _augment(W, a_src, a_dst, b, pad=_PAD):
    """Fold a_src/a_dst into W and zero-pad everything to `pad` lanes."""
    f_in, f_out = W.shape
    assert f_out + 2 <= pad, "feature width + 2 score lanes must fit in pad"
    W_aug = jnp.zeros((f_in, pad), jnp.float32)
    W_aug = W_aug.at[:, :f_out].set(W)
    W_aug = W_aug.at[:, pad - 2].set(W @ a_src[0])
    W_aug = W_aug.at[:, pad - 1].set(W @ a_dst[0])
    b_pad = jnp.zeros((1, pad), jnp.float32).at[:, :f_out].set(b)
    return W_aug, b_pad


def fold_gat_params(params, pad=_PAD):
    """One-time parameter preprocessing for the fused kernel."""
    p1, p2 = params["conv1"], params["conv2"]
    W1_aug, b1_pad = _augment(p1["W"], p1["a_src"], p1["a_dst"], p1["b"], pad)
    W2_aug, b2_pad = _augment(p2["W"], p2["a_src"], p2["a_dst"], p2["b"], pad)
    hid = p2["W"].shape[0]
    # Layer-2 weight must accept the padded (N, pad) hidden activation:
    # rows >= hid (including the score lanes) are zero.
    W2_full = jnp.zeros((pad, pad), jnp.float32).at[:hid, :].set(W2_aug)
    return {"W1": W1_aug, "b1": b1_pad, "W2": W2_full, "b2": b2_pad,
            "out_f": int(p2["W"].shape[1])}


def gat_forward(folded, x, A):
    """GAT.forward: c2(c1(x, A).relu(), A), as one fused Pallas call."""
    N, f_in = x.shape
    out_f = folded["out_f"]
    A_bf16 = A.astype(jnp.bfloat16)  # 0/1 mask -> exact in bf16, half the bytes

    flops = (2 * N * f_in * _PAD        # x @ W1_aug
             + 2 * N * _PAD * _PAD      # z1 @ W2_aug
             + 2 * 2 * N * N * _PAD     # two aggregation matmuls
             + 24 * N * N)              # elementwise softmax/mask work
    bytes_accessed = (x.size * 4 + A_bf16.size * 2
                      + folded["W1"].size * 4 + folded["b1"].size * 4
                      + folded["W2"].size * 4 + folded["b2"].size * 4
                      + N * _PAD * 4)
    cost = pl.CostEstimate(flops=flops,
                           transcendentals=2 * N * N,
                           bytes_accessed=bytes_accessed)

    out_pad = pl.pallas_call(
        _gat2_fused_kernel,
        out_shape=jax.ShapeDtypeStruct((N, _PAD), jnp.float32),
        in_specs=[pl.BlockSpec(memory_space=pltpu.MemorySpace.VMEM)] * 6,
        out_specs=pl.BlockSpec(memory_space=pltpu.MemorySpace.VMEM),
        cost_estimate=cost,
    )(x, A_bf16, folded["W1"], folded["b1"], folded["W2"], folded["b2"])
    return out_pad[:, :out_f]


def init_gat_params(key, in_f, hid, out_f):
    ks = jax.random.split(key, 6)

    def glorot(k, shape):
        fan_in, fan_out = shape[0], shape[-1]
        lim = (6.0 / (fan_in + fan_out)) ** 0.5
        return jax.random.uniform(k, shape, jnp.float32, -lim, lim)

    return {
        "conv1": {
            "W": glorot(ks[0], (in_f, hid)),
            "a_src": glorot(ks[1], (1, hid)),
            "a_dst": glorot(ks[2], (1, hid)),
            "b": jnp.zeros((1, hid), jnp.float32),
        },
        "conv2": {
            "W": glorot(ks[3], (hid, out_f)),
            "a_src": glorot(ks[4], (1, out_f)),
            "a_dst": glorot(ks[5], (1, out_f)),
            "b": jnp.zeros((1, out_f), jnp.float32),
        },
    }


if __name__ == "__main__":
    key = jax.random.PRNGKey(0)
    k_x, k_a, k_p = jax.random.split(key, 3)

    N, in_f, hid, out_f = 128, 16, 32, 8

    # Node features.
    x = jax.random.normal(k_x, (N, in_f), jnp.float32)

    # Dense symmetric adjacency with self-loops (binary).
    a_rand = jax.random.uniform(k_a, (N, N), jnp.float32)
    A = (a_rand < 0.1).astype(jnp.float32)
    A = jnp.maximum(A, A.T)
    A = jnp.maximum(A, jnp.eye(N, dtype=jnp.float32))

    params = init_gat_params(k_p, in_f, hid, out_f)
    folded = fold_gat_params(params)

    out = gat_forward(folded, x, A)
    jax.block_until_ready(out)
    assert out.shape == (N, out_f), out.shape
    print("KERNEL_OK")
</pallas_src>

<mosaic_0001>
module attributes {stable_mosaic.version = 11 : i64} {
  func.func @_gat2_fused_kernel(%arg0: memref<128x16xf32, #tpu.memory_space<vmem>>, %arg1: memref<128x128xbf16, #tpu.memory_space<vmem>>, %arg2: memref<16x128xf32, #tpu.memory_space<vmem>>, %arg3: memref<1x128xf32, #tpu.memory_space<vmem>>, %arg4: memref<128x128xf32, #tpu.memory_space<vmem>>, %arg5: memref<1x128xf32, #tpu.memory_space<vmem>>, %arg6: memref<128x128xf32, #tpu.memory_space<vmem>>) attributes {dimension_semantics = [], scalar_prefetch = 0 : i64, scratch_operands = 0 : i64, tpu.core_type = #tpu.core_type<tc>} {
    %c0 = arith.constant 0 : index
    %c0_0 = arith.constant 0 : index
    %0 = vector.load %arg0[%c0, %c0_0] : memref<128x16xf32, #tpu.memory_space<vmem>>, vector<128x16xf32>
    %c0_1 = arith.constant 0 : index
    %c0_2 = arith.constant 0 : index
    %1 = vector.load %arg1[%c0_1, %c0_2] : memref<128x128xbf16, #tpu.memory_space<vmem>>, vector<128x128xbf16>
    %cst = arith.constant 0.000000e+00 : bf16
    %2 = vector.broadcast %cst : bf16 to vector<128x128xbf16>
    %3 = arith.cmpf ogt, %1, %2 : vector<128x128xbf16>
    %c0_3 = arith.constant 0 : index
    %c0_4 = arith.constant 0 : index
    %4 = vector.load %arg2[%c0_3, %c0_4] : memref<16x128xf32, #tpu.memory_space<vmem>>, vector<16x128xf32>
    %cst_5 = arith.constant dense<0.000000e+00> : vector<128x128xf32>
    %5 = tpu.matmul %0, %4, %cst_5 {dimension_numbers = #tpu.dot_dimension_numbers<[1], [0], [0], [1], [0, 0, 1, 1], [], []>} : vector<128x16xf32>, vector<16x128xf32>, vector<128x128xf32> -> vector<128x128xf32>
    %c0_6 = arith.constant 0 : index
    %c0_7 = arith.constant 0 : index
    %6 = vector.load %arg3[%c0_6, %c0_7] : memref<1x128xf32, #tpu.memory_space<vmem>>, vector<1x128xf32>
    %7 = vector.extract_strided_slice %5 {offsets = [0, 126], sizes = [128, 1], strides = [1, 1]} : vector<128x128xf32> to vector<128x1xf32>
    %8 = vector.extract_strided_slice %5 {offsets = [0, 127], sizes = [128, 1], strides = [1, 1]} : vector<128x128xf32> to vector<128x1xf32>
    %9 = tpu.transpose %8, [1, 0] : vector<128x1xf32> -> vector<1x128xf32>
    %10 = vector.broadcast %7 : vector<128x1xf32> to vector<128x128xf32>
    %11 = vector.broadcast %9 : vector<1x128xf32> to vector<128x128xf32>
    %12 = arith.addf %10, %11 : vector<128x128xf32>
    %cst_8 = arith.constant 2.000000e-01 : f32
    %13 = vector.broadcast %cst_8 : f32 to vector<128x128xf32>
    %14 = arith.mulf %13, %12 : vector<128x128xf32>
    %15 = arith.maximumf %12, %14 : vector<128x128xf32>
    %cst_9 = arith.constant -1.000000e+30 : f32
    %16 = vector.broadcast %cst_9 : f32 to vector<128x128xf32>
    %17 = arith.select %3, %15, %16 : vector<128x128xi1>, vector<128x128xf32>
    %cst_10 = arith.constant dense<0xFF800000> : vector<128xf32>
    %18 = vector.multi_reduction <maximumf>, %17, %cst_10 [1] : vector<128x128xf32> to vector<128xf32>
    %19 = vector.shape_cast %18 : vector<128xf32> to vector<128x1xf32>
    %20 = vector.broadcast %19 : vector<128x1xf32> to vector<128x128xf32>
    %21 = arith.subf %17, %20 : vector<128x128xf32>
    %22 = math.exp %21 : vector<128x128xf32>
    %cst_11 = arith.constant dense<0.000000e+00> : vector<128xf32>
    %23 = vector.multi_reduction <add>, %22, %cst_11 [1] : vector<128x128xf32> to vector<128xf32>
    %24 = vector.shape_cast %23 : vector<128xf32> to vector<128x1xf32>
    %25 = tpu.reciprocal %24 {approx = true} : vector<128x1xf32> -> vector<128x1xf32>
    %26 = vector.broadcast %25 : vector<128x1xf32> to vector<128x128xf32>
    %27 = arith.mulf %22, %26 : vector<128x128xf32>
    %28 = arith.truncf %27 : vector<128x128xf32> to vector<128x128xbf16>
    %29 = arith.truncf %5 : vector<128x128xf32> to vector<128x128xbf16>
    %cst_12 = arith.constant dense<0.000000e+00> : vector<128x128xf32>
    %30 = tpu.matmul %28, %29, %cst_12 {dimension_numbers = #tpu.dot_dimension_numbers<[1], [0], [0], [1], [0, 0, 1, 1], [], []>} : vector<128x128xbf16>, vector<128x128xbf16>, vector<128x128xf32> -> vector<128x128xf32>
    %31 = vector.broadcast %6 : vector<1x128xf32> to vector<128x128xf32>
    %32 = arith.addf %30, %31 : vector<128x128xf32>
    %cst_13 = arith.constant 0.000000e+00 : f32
    %33 = vector.broadcast %cst_13 : f32 to vector<128x128xf32>
    %34 = arith.maximumf %32, %33 : vector<128x128xf32>
    %c0_14 = arith.constant 0 : index
    %c0_15 = arith.constant 0 : index
    %35 = vector.load %arg4[%c0_14, %c0_15] : memref<128x128xf32, #tpu.memory_space<vmem>>, vector<128x128xf32>
    %cst_16 = arith.constant dense<0.000000e+00> : vector<128x128xf32>
    %36 = tpu.matmul %34, %35, %cst_16 {dimension_numbers = #tpu.dot_dimension_numbers<[1], [0], [0], [1], [0, 0, 1, 1], [], []>} : vector<128x128xf32>, vector<128x128xf32>, vector<128x128xf32> -> vector<128x128xf32>
    %c0_17 = arith.constant 0 : index
    %c0_18 = arith.constant 0 : index
    %37 = vector.load %arg5[%c0_17, %c0_18] : memref<1x128xf32, #tpu.memory_space<vmem>>, vector<1x128xf32>
    %38 = vector.extract_strided_slice %36 {offsets = [0, 126], sizes = [128, 1], strides = [1, 1]} : vector<128x128xf32> to vector<128x1xf32>
    %39 = vector.extract_strided_slice %36 {offsets = [0, 127], sizes = [128, 1], strides = [1, 1]} : vector<128x128xf32> to vector<128x1xf32>
    %40 = tpu.transpose %39, [1, 0] : vector<128x1xf32> -> vector<1x128xf32>
    %41 = vector.broadcast %38 : vector<128x1xf32> to vector<128x128xf32>
    %42 = vector.broadcast %40 : vector<1x128xf32> to vector<128x128xf32>
    %43 = arith.addf %41, %42 : vector<128x128xf32>
    %cst_19 = arith.constant 2.000000e-01 : f32
    %44 = vector.broadcast %cst_19 : f32 to vector<128x128xf32>
    %45 = arith.mulf %44, %43 : vector<128x128xf32>
    %46 = arith.maximumf %43, %45 : vector<128x128xf32>
    %cst_20 = arith.constant -1.000000e+30 : f32
    %47 = vector.broadcast %cst_20 : f32 to vector<128x128xf32>
    %48 = arith.select %3, %46, %47 : vector<128x128xi1>, vector<128x128xf32>
    %cst_21 = arith.constant dense<0xFF800000> : vector<128xf32>
    %49 = vector.multi_reduction <maximumf>, %48, %cst_21 [1] : vector<128x128xf32> to vector<128xf32>
    %50 = vector.shape_cast %49 : vector<128xf32> to vector<128x1xf32>
    %51 = vector.broadcast %50 : vector<128x1xf32> to vector<128x128xf32>
    %52 = arith.subf %48, %51 : vector<128x128xf32>
    %53 = math.exp %52 : vector<128x128xf32>
    %cst_22 = arith.constant dense<0.000000e+00> : vector<128xf32>
    %54 = vector.multi_reduction <add>, %53, %cst_22 [1] : vector<128x128xf32> to vector<128xf32>
    %55 = vector.shape_cast %54 : vector<128xf32> to vector<128x1xf32>
    %56 = tpu.reciprocal %55 {approx = true} : vector<128x1xf32> -> vector<128x1xf32>
    %57 = vector.broadcast %56 : vector<128x1xf32> to vector<128x128xf32>
    %58 = arith.mulf %53, %57 : vector<128x128xf32>
    %59 = arith.truncf %58 : vector<128x128xf32> to vector<128x128xbf16>
    %60 = arith.truncf %36 : vector<128x128xf32> to vector<128x128xbf16>
    %cst_23 = arith.constant dense<0.000000e+00> : vector<128x128xf32>
    %61 = tpu.matmul %59, %60, %cst_23 {dimension_numbers = #tpu.dot_dimension_numbers<[1], [0], [0], [1], [0, 0, 1, 1], [], []>} : vector<128x128xbf16>, vector<128x128xbf16>, vector<128x128xf32> -> vector<128x128xf32>
    %62 = vector.broadcast %37 : vector<1x128xf32> to vector<128x128xf32>
    %63 = arith.addf %61, %62 : vector<128x128xf32>
    %c0_24 = arith.constant 0 : index
    %c0_25 = arith.constant 0 : index
    %64 = vector.load %arg6[%c0_24, %c0_25] : memref<128x128xf32, #tpu.memory_space<vmem>>, vector<128x128xf32>
    tpu.vector_store %arg6[%c0_24, %c0_25], %63 {strides = array<i32>} : memref<128x128xf32, #tpu.memory_space<vmem>>, vector<128x128xf32>,
    return
  }
}

</mosaic_0001>

<llo_original>
// kernel: tpu_custom_call.1
$region0: #{tpu_custom_call.1}
  #allocation0 [shape = 'u32[]', space=smem, size = 0x4, offset = 0x4, fixed_abs, tag = 'smem constant byte address 0x4 - core index']
  #allocation1 [shape = 'u32[72,128]{1,0:T(1,128)}', space=vmem, size = 0x9000, scoped, tag = 'internal scratch']
  %s0 = inlined_call_operand.vmem [shape: f32[128,16], index: 0, kind: input, shape index: {}]
  %s1 = inlined_call_operand.hbm [shape: bf16[128,128], index: 1, kind: input, shape index: {}]
  %s2 = inlined_call_operand.vmem [shape: f32[16,128], index: 2, kind: input, shape index: {}]
  %s3 = inlined_call_operand.vmem [shape: f32[1,128], index: 3, kind: input, shape index: {}]
  %s4 = inlined_call_operand.vmem [shape: f32[128,128], index: 4, kind: input, shape index: {}]
  %s5 = inlined_call_operand.vmem [shape: f32[1,128], index: 5, kind: input, shape index: {}]
  %s6 = inlined_call_operand.hbm [shape: f32[128,128], index: 6, kind: output, shape index: {}]
  %s7 = sld [smem:[#allocation0]]
  $region38: #{tpu_custom_call.1} parent=0
    _
  %s9 = ssub.s32 1, %s7
  %s10 = scalar_select 0, %s9, %s7
  $region1: #{tpu_custom_call.1} parent=0
    #allocation2 [shape = 'u8[32768]{0}', space=vmem, size = 0x8000, scoped, tag = 'input window, operand 1, single buffered']
    #allocation3 [shape = 's32[1]{0}', space=sflag, size = 0x4, scoped, tag = 'scoped memory for tpu_custom_call.1']
    #allocation4 [shape = 's32[1]{0}', space=sflag, size = 0x4, scoped, tag = 'scoped memory for tpu_custom_call.1']
    #allocation5 [shape = 'u8[65536]{0}', space=vmem, size = 0x10000, scoped, tag = 'output window, operand 0, single buffered']
    %11 = vsyncpa [#allocation3], 0
    %12 = vsyncpa [#allocation4], 0
    // Predicated region
    $region2: #{tpu_custom_call.1} parent=1 // pred_check
      _
    $region3: #{tpu_custom_call.1} parent=1 // pred_check_branch
      %14 = sbr.rel (0) target = $region5
    $region4: #{tpu_custom_call.1} parent=1 // pred_region
      _
    $region5: #{tpu_custom_call.1} parent=1 // pred_fallthru
      _
    // Predicated region
    $region6: #{tpu_custom_call.1} parent=1 // pred_check
      _
    $region7: #{tpu_custom_call.1} parent=1 // pred_check_branch
      %16 = sbr.rel (0) target = $region9
    $region8: #{tpu_custom_call.1} parent=1 // pred_region
      %18 = vsyncadd [#allocation3], 0
      %s19 = sshll.u32 %s1, 4
      %s20 = int_to_ptr.hbm [resolvable:$true] %s19
      %s21 = sshll.u32 [#allocation2], 4
      %s22 = int_to_ptr.vmem [resolvable:$true] %s21
      %27 = dma.hbm_to_vmem [thread:$0]  %s20, 1024, %s22, [#allocation3], 64, 64, 4
    $region9: #{tpu_custom_call.1} parent=1 // pred_fallthru
      _
    // Predicated region
    $region10: #{tpu_custom_call.1} parent=1 // pred_check
      _
    $region11: #{tpu_custom_call.1} parent=1 // pred_check_branch
      %29 = sbr.rel (0) target = $region13
    $region12: #{tpu_custom_call.1} parent=1 // pred_region
      _
    $region13: #{tpu_custom_call.1} parent=1 // pred_fallthru
      _
    // Predicated region
    $region14: #{tpu_custom_call.1} parent=1 // pred_check
      _
    $region15: #{tpu_custom_call.1} parent=1 // pred_check_branch
      %31 = sbr.rel (0) target = $region17
    $region16: #{tpu_custom_call.1} parent=1 // pred_region
      _
    $region17: #{tpu_custom_call.1} parent=1 // pred_fallthru
      _
    // Predicated region
    $region18: #{tpu_custom_call.1} parent=1 // pred_check
      _
    $region19: #{tpu_custom_call.1} parent=1 // pred_check_branch
      %33 = sbr.rel (0) target = $region21
    $region20: #{tpu_custom_call.1} parent=1 // pred_region
      _
    $region21: #{tpu_custom_call.1} parent=1 // pred_fallthru
      _
    // Predicated region
    $region22: #{tpu_custom_call.1} parent=1 // pred_check
      _
    $region23: #{tpu_custom_call.1} parent=1 // pred_check_branch
      %35 = sbr.rel (0) target = $region25
    $region24: #{tpu_custom_call.1} parent=1 // pred_region
      _
    $region25: #{tpu_custom_call.1} parent=1 // pred_fallthru
      _
    // Predicated region
    $region26: #{tpu_custom_call.1} parent=1 // pred_check
      _
    $region27: #{tpu_custom_call.1} parent=1 // pred_check_branch
      %37 = sbr.rel (0) target = $region29
    $region28: #{tpu_custom_call.1} parent=1 // pred_region
      %39 = dma.done [#allocation3], 1024
    $region29: #{tpu_custom_call.1} parent=1 // pred_fallthru
      _
    %v40 = vld [vmem:[%s0] sm:$0xff]
    %v41 = vld [vmem:[%s0 + $0x8] sm:$0xff]
    %v42 = vld [vmem:[%s0 + $0x10] sm:$0xff]
    %v43 = vld [vmem:[%s0 + $0x18] sm:$0xff]
    %v44 = vld [vmem:[%s0 + $0x20] sm:$0xff]
    %v45 = vld [vmem:[%s0 + $0x28] sm:$0xff]
    %v46 = vld [vmem:[%s0 + $0x30] sm:$0xff]
    %v47 = vld [vmem:[%s0 + $0x38] sm:$0xff]
    %v48 = vld [vmem:[%s0 + $0x40] sm:$0xff]
    %v49 = vld [vmem:[%s0 + $0x48] sm:$0xff]
    %v50 = vld [vmem:[%s0 + $0x50] sm:$0xff]
    %v51 = vld [vmem:[%s0 + $0x58] sm:$0xff]
    %v52 = vld [vmem:[%s0 + $0x60] sm:$0xff]
    %v53 = vld [vmem:[%s0 + $0x68] sm:$0xff]
    %v54 = vld [vmem:[%s0 + $0x70] sm:$0xff]
    %v55 = vld [vmem:[%s0 + $0x78] sm:$0xff]
    %v56 = vld [vmem:[#allocation2] sm:$0xf]
    %v57 = vld [vmem:[#allocation2 + $0x4] sm:$0xf]
    %v58 = vld [vmem:[#allocation2 + $0x8] sm:$0xf]
    %v59 = vld [vmem:[#allocation2 + $0xc] sm:$0xf]
    %v60 = vld [vmem:[#allocation2 + $0x10] sm:$0xf]
    %v61 = vld [vmem:[#allocation2 + $0x14] sm:$0xf]
    %v62 = vld [vmem:[#allocation2 + $0x18] sm:$0xf]
    %v63 = vld [vmem:[#allocation2 + $0x1c] sm:$0xf]
    %v64 = vld [vmem:[#allocation2 + $0x20] sm:$0xf]
    %v65 = vld [vmem:[#allocation2 + $0x24] sm:$0xf]
    %v66 = vld [vmem:[#allocation2 + $0x28] sm:$0xf]
    %v67 = vld [vmem:[#allocation2 + $0x2c] sm:$0xf]
    %v68 = vld [vmem:[#allocation2 + $0x30] sm:$0xf]
    %v69 = vld [vmem:[#allocation2 + $0x34] sm:$0xf]
    %v70 = vld [vmem:[#allocation2 + $0x38] sm:$0xf]
    %v71 = vld [vmem:[#allocation2 + $0x3c] sm:$0xf]
    %v72 = vunpack.c.l.bf16 %v56
    %v73 = vunpack.c.l.bf16 %v57
    %v74 = vunpack.c.l.bf16 %v58
    %v75 = vunpack.c.l.bf16 %v59
    %v76 = vunpack.c.l.bf16 %v60
    %v77 = vunpack.c.l.bf16 %v61
    %v78 = vunpack.c.l.bf16 %v62
    %v79 = vunpack.c.l.bf16 %v63
    %v80 = vunpack.c.l.bf16 %v64
    %v81 = vunpack.c.l.bf16 %v65
    %v82 = vunpack.c.l.bf16 %v66
    %v83 = vunpack.c.l.bf16 %v67
    %v84 = vunpack.c.l.bf16 %v68
    %v85 = vunpack.c.l.bf16 %v69
    %v86 = vunpack.c.l.bf16 %v70
    %v87 = vunpack.c.l.bf16 %v71
    %vm88 = vcmp.gt.f32.partialorder %v72, 0.0
    %vm89 = vcmp.gt.f32.partialorder %v73, 0.0
    %vm90 = vcmp.gt.f32.partialorder %v74, 0.0
    %vm91 = vcmp.gt.f32.partialorder %v75, 0.0
    %vm92 = vcmp.gt.f32.partialorder %v76, 0.0
    %vm93 = vcmp.gt.f32.partialorder %v77, 0.0
    %vm94 = vcmp.gt.f32.partialorder %v78, 0.0
    %vm95 = vcmp.gt.f32.partialorder %v79, 0.0
    %vm96 = vcmp.gt.f32.partialorder %v80, 0.0
    %vm97 = vcmp.gt.f32.partialorder %v81, 0.0
    %vm98 = vcmp.gt.f32.partialorder %v82, 0.0
    %vm99 = vcmp.gt.f32.partialorder %v83, 0.0
    %vm100 = vcmp.gt.f32.partialorder %v84, 0.0
    %vm101 = vcmp.gt.f32.partialorder %v85, 0.0
    %vm102 = vcmp.gt.f32.partialorder %v86, 0.0
    %vm103 = vcmp.gt.f32.partialorder %v87, 0.0
    %v104 = vld [vmem:[%s2] sm:$0xff]
    %v105 = vld [vmem:[%s2 + $0x8] sm:$0xff]
    %vm106 = vcmask 130048
    %v108 = vsel %vm106, %v40, 0
    %v111 = vsel %vm106, %v41, 0
    %v114 = vsel %vm106, %v42, 0
    %v117 = vsel %vm106, %v43, 0
    %v120 = vsel %vm106, %v44, 0
    %v123 = vsel %vm106, %v45, 0
    %v126 = vsel %vm106, %v46, 0
    %v129 = vsel %vm106, %v47, 0
    %v132 = vsel %vm106, %v48, 0
    %v135 = vsel %vm106, %v49, 0
    %v138 = vsel %vm106, %v50, 0
    %v141 = vsel %vm106, %v51, 0
    %v144 = vsel %vm106, %v52, 0
    %v147 = vsel %vm106, %v53, 0
    %v150 = vsel %vm106, %v54, 0
    %v153 = vsel %vm106, %v55, 0
    %155 = vmatpush.msra.mxu0 0.0
    %156 = vmatpush.msra.mxu0 0.0
    %157 = vmatpush.msra.mxu0 0.0
    %158 = vmatpush.msra.mxu0 0.0
    %159 = vmatpush.msra.mxu0 0.0
    %160 = vmatpush.msra.mxu0 0.0
    %161 = vmatpush.msra.mxu0 0.0
    %162 = vmatpush.msra.mxu0 0.0
    %163 = vmatpush.msra.mxu0 0.0
    %164 = vmatpush.msra.mxu0 0.0
    %165 = vmatpush.msra.mxu0 0.0
    %166 = vmatpush.msra.mxu0 0.0
    %167 = vmatpush.msra.mxu0 0.0
    %168 = vmatpush.msra.mxu0 0.0
    %169 = vmatpush.msra.mxu0 %v105
    %170 = vmatpush.msra.mxu0 %v104
    %171 = vmatmul.f32.gmra.mxu0 %v108
    %v172 = vpop.f32.mrf.mxu0
    %v173 = vadd.f32 0.0, %v172
    %174 = vmatmul.f32.gmra.mxu0 %v111
    %v175 = vpop.f32.mrf.mxu0
    %v176 = vadd.f32 0.0, %v175
    %177 = vmatmul.f32.gmra.mxu0 %v114
    %v178 = vpop.f32.mrf.mxu0
    %v179 = vadd.f32 0.0, %v178
    %180 = vmatmul.f32.gmra.mxu0 %v117
    %v181 = vpop.f32.mrf.mxu0
    %v182 = vadd.f32 0.0, %v181
    %183 = vmatmul.f32.gmra.mxu0 %v120
    %v184 = vpop.f32.mrf.mxu0
    %v185 = vadd.f32 0.0, %v184
    %186 = vmatmul.f32.gmra.mxu0 %v123
    %v187 = vpop.f32.mrf.mxu0
    %v188 = vadd.f32 0.0, %v187
    %189 = vmatmul.f32.gmra.mxu0 %v126
    %v190 = vpop.f32.mrf.mxu0
    %v191 = vadd.f32 0.0, %v190
    %192 = vmatmul.f32.gmra.mxu0 %v129
    %v193 = vpop.f32.mrf.mxu0
    %v194 = vadd.f32 0.0, %v193
    %195 = vmatmul.f32.gmra.mxu0 %v132
    %v196 = vpop.f32.mrf.mxu0
    %v197 = vadd.f32 0.0, %v196
    %198 = vmatmul.f32.gmra.mxu0 %v135
    %v199 = vpop.f32.mrf.mxu0
    %v200 = vadd.f32 0.0, %v199
    %201 = vmatmul.f32.gmra.mxu0 %v138
    %v202 = vpop.f32.mrf.mxu0
    %v203 = vadd.f32 0.0, %v202
    %204 = vmatmul.f32.gmra.mxu0 %v141
    %v205 = vpop.f32.mrf.mxu0
    %v206 = vadd.f32 0.0, %v205
    %207 = vmatmul.f32.gmra.mxu0 %v144
    %v208 = vpop.f32.mrf.mxu0
    %v209 = vadd.f32 0.0, %v208
    %210 = vmatmul.f32.gmra.mxu0 %v147
    %v211 = vpop.f32.mrf.mxu0
    %v212 = vadd.f32 0.0, %v211
    %213 = vmatmul.f32.gmra.mxu0 %v150
    %v214 = vpop.f32.mrf.mxu0
    %v215 = vadd.f32 0.0, %v214
    %216 = vmatmul.f32.gmra.mxu0 %v153
    %v217 = vpop.f32.mrf.mxu0
    %v218 = vadd.f32 0.0, %v217
    %219 = vdwg.mxu0
    %v220 = vld [vmem:[%s3] sm:$0x1]
    %237 = vrot.lane.b32.xlu0 %v173, 1
    %v238 = vpop.permute.xlu0 %237
    %239 = vrot.lane.b32.xlu0 %v176, 1
    %v240 = vpop.permute.xlu0 %239
    %241 = vrot.lane.b32.xlu0 %v179, 1
    %v242 = vpop.permute.xlu0 %241
    %243 = vrot.lane.b32.xlu0 %v182, 1
    %v244 = vpop.permute.xlu0 %243
    %245 = vrot.lane.b32.xlu0 %v185, 1
    %v246 = vpop.permute.xlu0 %245
    %247 = vrot.lane.b32.xlu0 %v188, 1
    %v248 = vpop.permute.xlu0 %247
    %249 = vrot.lane.b32.xlu0 %v191, 1
    %v250 = vpop.permute.xlu0 %249
    %251 = vrot.lane.b32.xlu0 %v194, 1
    %v252 = vpop.permute.xlu0 %251
    %253 = vrot.lane.b32.xlu0 %v197, 1
    %v254 = vpop.permute.xlu0 %253
    %255 = vrot.lane.b32.xlu0 %v200, 1
    %v256 = vpop.permute.xlu0 %255
    %257 = vrot.lane.b32.xlu0 %v203, 1
    %v258 = vpop.permute.xlu0 %257
    %259 = vrot.lane.b32.xlu0 %v206, 1
    %v260 = vpop.permute.xlu0 %259
    %261 = vrot.lane.b32.xlu0 %v209, 1
    %v262 = vpop.permute.xlu0 %261
    %263 = vrot.lane.b32.xlu0 %v212, 1
    %v264 = vpop.permute.xlu0 %263
    %265 = vrot.lane.b32.xlu0 %v215, 1
    %v266 = vpop.permute.xlu0 %265
    %267 = vrot.lane.b32.xlu0 %v218, 1
    %v268 = vpop.permute.xlu0 %267
    %285 = vxpose.xlu0.b32.start [1/16] %v238, 128
    %286 = vxpose.xlu0.b32.cont [2/16] %v240, 128
    %287 = vxpose.xlu0.b32.cont [3/16] %v242, 128
    %288 = vxpose.xlu0.b32.cont [4/16] %v244, 128
    %289 = vxpose.xlu0.b32.cont [5/16] %v246, 128
    %290 = vxpose.xlu0.b32.cont [6/16] %v248, 128
    %291 = vxpose.xlu0.b32.cont [7/16] %v250, 128
    %292 = vxpose.xlu0.b32.cont [8/16] %v252, 128
    %293 = vxpose.xlu0.b32.cont [9/16] %v254, 128
    %294 = vxpose.xlu0.b32.cont [10/16] %v256, 128
    %295 = vxpose.xlu0.b32.cont [11/16] %v258, 128
    %296 = vxpose.xlu0.b32.cont [12/16] %v260, 128
    %297 = vxpose.xlu0.b32.cont [13/16] %v262, 128
    %298 = vxpose.xlu0.b32.cont [14/16] %v264, 128
    %299 = vxpose.xlu0.b32.cont [15/16] %v266, 128
    %300 = vxpose.xlu0.b32.end [16/16] %v268, 128
    %v301 = vpop.trf.xlu0
    %v302 = vpop.trf.xlu0
    %v303 = vpop.trf.xlu0
    %v304 = vpop.trf.xlu0
    %v305 = vpop.trf.xlu0
    %v306 = vpop.trf.xlu0
    %v307 = vpop.trf.xlu0
    %v308 = vpop.trf.xlu0
    %v309 = vpop.trf.xlu0
    %v310 = vpop.trf.xlu0
    %v311 = vpop.trf.xlu0
    %v312 = vpop.trf.xlu0
    %v313 = vpop.trf.xlu0
    %v314 = vpop.trf.xlu0
    %v315 = vpop.trf.xlu0
    %v316 = vpop.trf.xlu0
    %317 = vset.pattern.permute.xlu0 126
    %318 = vperm.xlu0 %317, %v173
    %v319 = vpop.permute.xlu0 %318
    %321 = vset.pattern.permute.xlu0 126
    %322 = vperm.xlu0 %321, %v176
    %v323 = vpop.permute.xlu0 %322
    %325 = vset.pattern.permute.xlu0 126
    %326 = vperm.xlu0 %325, %v179
    %v327 = vpop.permute.xlu0 %326
    %329 = vset.pattern.permute.xlu0 126
    %330 = vperm.xlu0 %329, %v182
    %v331 = vpop.permute.xlu0 %330
    %333 = vset.pattern.permute.xlu0 126
    %334 = vperm.xlu0 %333, %v185
    %v335 = vpop.permute.xlu0 %334
    %337 = vset.pattern.permute.xlu0 126
    %338 = vperm.xlu0 %337, %v188
    %v339 = vpop.permute.xlu0 %338
    %341 = vset.pattern.permute.xlu0 126
    %342 = vperm.xlu0 %341, %v191
    %v343 = vpop.permute.xlu0 %342
    %345 = vset.pattern.permute.xlu0 126
    %346 = vperm.xlu0 %345, %v194
    %v347 = vpop.permute.xlu0 %346
    %349 = vset.pattern.permute.xlu0 126
    %350 = vperm.xlu0 %349, %v197
    %v351 = vpop.permute.xlu0 %350
    %353 = vset.pattern.permute.xlu0 126
    %354 = vperm.xlu0 %353, %v200
    %v355 = vpop.permute.xlu0 %354
    %357 = vset.pattern.permute.xlu0 126
    %358 = vperm.xlu0 %357, %v203
    %v359 = vpop.permute.xlu0 %358
    %361 = vset.pattern.permute.xlu0 126
    %362 = vperm.xlu0 %361, %v206
    %v363 = vpop.permute.xlu0 %362
    %365 = vset.pattern.permute.xlu0 126
    %366 = vperm.xlu0 %365, %v209
    %v367 = vpop.permute.xlu0 %366
    %369 = vset.pattern.permute.xlu0 126
    %370 = vperm.xlu0 %369, %v212
    %v371 = vpop.permute.xlu0 %370
    %373 = vset.pattern.permute.xlu0 126
    %374 = vperm.xlu0 %373, %v215
    %v375 = vpop.permute.xlu0 %374
    %377 = vset.pattern.permute.xlu0 126
    %378 = vperm.xlu0 %377, %v218
    %v379 = vpop.permute.xlu0 %378
    %v381 = vperm.slane %v301, 0
    %v382 = vadd.f32 %v319, %v381
    %v383 = vadd.f32 %v323, %v381
    %v384 = vadd.f32 %v327, %v381
    %v385 = vadd.f32 %v331, %v381
    %v386 = vadd.f32 %v335, %v381
    %v387 = vadd.f32 %v339, %v381
    %v388 = vadd.f32 %v343, %v381
    %v389 = vadd.f32 %v347, %v381
    %v390 = vadd.f32 %v351, %v381
    %v391 = vadd.f32 %v355, %v381
    %v392 = vadd.f32 %v359, %v381
    %v393 = vadd.f32 %v363, %v381
    %v394 = vadd.f32 %v367, %v381
    %v395 = vadd.f32 %v371, %v381
    %v396 = vadd.f32 %v375, %v381
    %v397 = vadd.f32 %v379, %v381
    %v398 = vmul.f32 %v382, 0.2
    %v399 = vmul.f32 %v383, 0.2
    %v400 = vmul.f32 %v384, 0.2
    %v401 = vmul.f32 %v385, 0.2
    %v402 = vmul.f32 %v386, 0.2
    %v403 = vmul.f32 %v387, 0.2
    %v404 = vmul.f32 %v388, 0.2
    %v405 = vmul.f32 %v389, 0.2
    %v406 = vmul.f32 %v390, 0.2
    %v407 = vmul.f32 %v391, 0.2
    %v408 = vmul.f32 %v392, 0.2
    %v409 = vmul.f32 %v393, 0.2
    %v410 = vmul.f32 %v394, 0.2
    %v411 = vmul.f32 %v395, 0.2
    %v412 = vmul.f32 %v396, 0.2
    %v413 = vmul.f32 %v397, 0.2
    %v414 = vmax.f32 %v382, %v398
    %v415 = vmax.f32 %v383, %v399
    %v416 = vmax.f32 %v384, %v400
    %v417 = vmax.f32 %v385, %v401
    %v418 = vmax.f32 %v386, %v402
    %v419 = vmax.f32 %v387, %v403
    %v420 = vmax.f32 %v388, %v404
    %v421 = vmax.f32 %v389, %v405
    %v422 = vmax.f32 %v390, %v406
    %v423 = vmax.f32 %v391, %v407
    %v424 = vmax.f32 %v392, %v408
    %v425 = vmax.f32 %v393, %v409
    %v426 = vmax.f32 %v394, %v410
    %v427 = vmax.f32 %v395, %v411
    %v428 = vmax.f32 %v396, %v412
    %v429 = vmax.f32 %v397, %v413
    %v430 = vsel %vm88, %v414, -1e+30
    %v431 = vsel %vm89, %v415, -1e+30
    %v432 = vsel %vm90, %v416, -1e+30
    %v433 = vsel %vm91, %v417, -1e+30
    %v434 = vsel %vm92, %v418, -1e+30
    %v435 = vsel %vm93, %v419, -1e+30
    %v436 = vsel %vm94, %v420, -1e+30
    %v437 = vsel %vm95, %v421, -1e+30
    %v438 = vsel %vm96, %v422, -1e+30
    %v439 = vsel %vm97, %v423, -1e+30
    %v440 = vsel %vm98, %v424, -1e+30
    %v441 = vsel %vm99, %v425, -1e+30
    %v442 = vsel %vm100, %v426, -1e+30
    %v443 = vsel %vm101, %v427, -1e+30
    %v444 = vsel %vm102, %v428, -1e+30
    %v445 = vsel %vm103, %v429, -1e+30
    %446 = vmax.xlane.f32.xlu0 %v430
    %v447 = vpop.xlane.xlu0 %446
    %448 = vmax.xlane.f32.xlu0 %v431
    %v449 = vpop.xlane.xlu0 %448
    %450 = vmax.xlane.f32.xlu0 %v432
    %v451 = vpop.xlane.xlu0 %450
    %452 = vmax.xlane.f32.xlu0 %v433
    %v453 = vpop.xlane.xlu0 %452
    %454 = vmax.xlane.f32.xlu0 %v434
    %v455 = vpop.xlane.xlu0 %454
    %456 = vmax.xlane.f32.xlu0 %v435
    %v457 = vpop.xlane.xlu0 %456
    %458 = vmax.xlane.f32.xlu0 %v436
    %v459 = vpop.xlane.xlu0 %458
    %460 = vmax.xlane.f32.xlu0 %v437
    %v461 = vpop.xlane.xlu0 %460
    %462 = vmax.xlane.f32.xlu0 %v438
    %v463 = vpop.xlane.xlu0 %462
    %464 = vmax.xlane.f32.xlu0 %v439
    %v465 = vpop.xlane.xlu0 %464
    %466 = vmax.xlane.f32.xlu0 %v440
    %v467 = vpop.xlane.xlu0 %466
    %468 = vmax.xlane.f32.xlu0 %v441
    %v469 = vpop.xlane.xlu0 %468
    %470 = vmax.xlane.f32.xlu0 %v442
    %v471 = vpop.xlane.xlu0 %470
    %472 = vmax.xlane.f32.xlu0 %v443
    %v473 = vpop.xlane.xlu0 %472
    %474 = vmax.xlane.f32.xlu0 %v444
    %v475 = vpop.xlane.xlu0 %474
    %476 = vmax.xlane.f32.xlu0 %v445
    %v477 = vpop.xlane.xlu0 %476
    %v478 = vsub.f32 %v430, %v447
    %v479 = vsub.f32 %v431, %v449
    %v480 = vsub.f32 %v432, %v451
    %v481 = vsub.f32 %v433, %v453
    %v482 = vsub.f32 %v434, %v455
    %v483 = vsub.f32 %v435, %v457
    %v484 = vsub.f32 %v436, %v459
    %v485 = vsub.f32 %v437, %v461
    %v486 = vsub.f32 %v438, %v463
    %v487 = vsub.f32 %v439, %v465
    %v488 = vsub.f32 %v440, %v467
    %v489 = vsub.f32 %v441, %v469
    %v490 = vsub.f32 %v442, %v471
    %v491 = vsub.f32 %v443, %v473
    %v492 = vsub.f32 %v444, %v475
    %v493 = vsub.f32 %v445, %v477
    %v494 = vmul.f32 %v478, 1.442695
    %v495 = vpow.pop %v494
    %v496 = vmul.f32 %v479, 1.442695
    %v497 = vpow.pop %v496
    %v498 = vmul.f32 %v480, 1.442695
    %v499 = vpow.pop %v498
    %v500 = vmul.f32 %v481, 1.442695
    %v501 = vpow.pop %v500
    %v502 = vmul.f32 %v482, 1.442695
    %v503 = vpow.pop %v502
    %v504 = vmul.f32 %v483, 1.442695
    %v505 = vpow.pop %v504
    %v506 = vmul.f32 %v484, 1.442695
    %v507 = vpow.pop %v506
    %v508 = vmul.f32 %v485, 1.442695
    %v509 = vpow.pop %v508
    %v510 = vmul.f32 %v486, 1.442695
    %v511 = vpow.pop %v510
    %v512 = vmul.f32 %v487, 1.442695
    %v513 = vpow.pop %v512
    %v514 = vmul.f32 %v488, 1.442695
    %v515 = vpow.pop %v514
    %v516 = vmul.f32 %v489, 1.442695
    %v517 = vpow.pop %v516
    %v518 = vmul.f32 %v490, 1.442695
    %v519 = vpow.pop %v518
    %v520 = vmul.f32 %v491, 1.442695
    %v521 = vpow.pop %v520
    %v522 = vmul.f32 %v492, 1.442695
    %v523 = vpow.pop %v522
    %v524 = vmul.f32 %v493, 1.442695
    %v525 = vpow.pop %v524
    %526 = vadd.xlane.f32.xlu0 %v495
    %v527 = vpop.xlane.xlu0 %526
    %528 = vadd.xlane.f32.xlu0 %v497
    %v529 = vpop.xlane.xlu0 %528
    %530 = vadd.xlane.f32.xlu0 %v499
    %v531 = vpop.xlane.xlu0 %530
    %532 = vadd.xlane.f32.xlu0 %v501
    %v533 = vpop.xlane.xlu0 %532
    %534 = vadd.xlane.f32.xlu0 %v503
    %v535 = vpop.xlane.xlu0 %534
    %536 = vadd.xlane.f32.xlu0 %v505
    %v537 = vpop.xlane.xlu0 %536
    %538 = vadd.xlane.f32.xlu0 %v507
    %v539 = vpop.xlane.xlu0 %538
    %540 = vadd.xlane.f32.xlu0 %v509
    %v541 = vpop.xlane.xlu0 %540
    %542 = vadd.xlane.f32.xlu0 %v511
    %v543 = vpop.xlane.xlu0 %542
    %544 = vadd.xlane.f32.xlu0 %v513
    %v545 = vpop.xlane.xlu0 %544
    %546 = vadd.xlane.f32.xlu0 %v515
    %v547 = vpop.xlane.xlu0 %546
    %548 = vadd.xlane.f32.xlu0 %v517
    %v549 = vpop.xlane.xlu0 %548
    %550 = vadd.xlane.f32.xlu0 %v519
    %v551 = vpop.xlane.xlu0 %550
    %552 = vadd.xlane.f32.xlu0 %v521
    %v553 = vpop.xlane.xlu0 %552
    %554 = vadd.xlane.f32.xlu0 %v523
    %v555 = vpop.xlane.xlu0 %554
    %556 = vadd.xlane.f32.xlu0 %v525
    %v557 = vpop.xlane.xlu0 %556
    %v558 = vrcp.pop %v527
    %v559 = vrcp.pop %v529
    %v560 = vrcp.pop %v531
    %v561 = vrcp.pop %v533
    %v562 = vrcp.pop %v535
    %v563 = vrcp.pop %v537
    %v564 = vrcp.pop %v539
    %v565 = vrcp.pop %v541
    %v566 = vrcp.pop %v543
    %v567 = vrcp.pop %v545
    %v568 = vrcp.pop %v547
    %v569 = vrcp.pop %v549
    %v570 = vrcp.pop %v551
    %v571 = vrcp.pop %v553
    %v572 = vrcp.pop %v555
    %v573 = vrcp.pop %v557
    %v574 = vmul.f32 %v495, %v558
    %v575 = vmul.f32 %v497, %v559
    %v576 = vmul.f32 %v499, %v560
    %v577 = vmul.f32 %v501, %v561
    %v578 = vmul.f32 %v503, %v562
    %v579 = vmul.f32 %v505, %v563
    %v580 = vmul.f32 %v507, %v564
    %v581 = vmul.f32 %v509, %v565
    %v582 = vmul.f32 %v511, %v566
    %v583 = vmul.f32 %v513, %v567
    %v584 = vmul.f32 %v515, %v568
    %v585 = vmul.f32 %v517, %v569
    %v586 = vmul.f32 %v519, %v570
    %v587 = vmul.f32 %v521, %v571
    %v588 = vmul.f32 %v523, %v572
    %v589 = vmul.f32 %v525, %v573
    %v590 = vpack.c.bf16 %v575, %v574
    %v591 = vpack.c.bf16 %v577, %v576
    %v592 = vpack.c.bf16 %v579, %v578
    %v593 = vpack.c.bf16 %v581, %v580
    %v594 = vpack.c.bf16 %v583, %v582
    %v595 = vpack.c.bf16 %v585, %v584
    %v596 = vpack.c.bf16 %v587, %v586
    %v597 = vpack.c.bf16 %v589, %v588
    %v598 = vpack.c.bf16 %v176, %v173
    %v599 = vpack.c.bf16 %v182, %v179
    %v600 = vpack.c.bf16 %v188, %v185
    %v601 = vpack.c.bf16 %v194, %v191
    %v602 = vpack.c.bf16 %v200, %v197
    %v603 = vpack.c.bf16 %v206, %v203
    %v604 = vpack.c.bf16 %v212, %v209
    %v605 = vpack.c.bf16 %v218, %v215
    %v607 = vperm.slane %v220, 0
    %609 = vmatpush.bf16.msra.mxu0 %v605
    %610 = vmatpush.bf16.msra.mxu0 %v604
    %611 = vmatpush.bf16.msra.mxu0 %v603
    %612 = vmatpush.bf16.msra.mxu0 %v602
    %613 = vmatpush.bf16.msra.mxu0 %v601
    %614 = vmatpush.bf16.msra.mxu0 %v600
    %615 = vmatpush.bf16.msra.mxu0 %v599
    %616 = vmatpush.bf16.msra.mxu0 %v598
    %617 = vmatmul.bf16.gmra.mxu0 %v590
    %v618 = vpop.f32.mrf.mxu0
    %v619 = vadd.f32 %v607, %v618
    %v620 = vpop.f32.mrf.mxu0
    %v621 = vadd.f32 %v607, %v620
    %622 = vmatmul.bf16.gmra.mxu0 %v591
    %v623 = vpop.f32.mrf.mxu0
    %v624 = vadd.f32 %v607, %v623
    %v625 = vpop.f32.mrf.mxu0
    %v626 = vadd.f32 %v607, %v625
    %627 = vmatmul.bf16.gmra.mxu0 %v592
    %v628 = vpop.f32.mrf.mxu0
    %v629 = vadd.f32 %v607, %v628
    %v630 = vpop.f32.mrf.mxu0
    %v631 = vadd.f32 %v607, %v630
    %632 = vmatmul.bf16.gmra.mxu0 %v593
    %v633 = vpop.f32.mrf.mxu0
    %v634 = vadd.f32 %v607, %v633
    %v635 = vpop.f32.mrf.mxu0
    %v636 = vadd.f32 %v607, %v635
    %637 = vmatmul.bf16.gmra.mxu0 %v594
    %v638 = vpop.f32.mrf.mxu0
    %v639 = vadd.f32 %v607, %v638
    %v640 = vpop.f32.mrf.mxu0
    %v641 = vadd.f32 %v607, %v640
    %642 = vmatmul.bf16.gmra.mxu0 %v595
    %v643 = vpop.f32.mrf.mxu0
    %v644 = vadd.f32 %v607, %v643
    %v645 = vpop.f32.mrf.mxu0
    %v646 = vadd.f32 %v607, %v645
    %647 = vmatmul.bf16.gmra.mxu0 %v596
    %v648 = vpop.f32.mrf.mxu0
    %v649 = vadd.f32 %v607, %v648
    %v650 = vpop.f32.mrf.mxu0
    %v651 = vadd.f32 %v607, %v650
    %652 = vmatmul.bf16.gmra.mxu0 %v597
    %v653 = vpop.f32.mrf.mxu0
    %v654 = vadd.f32 %v607, %v653
    %v655 = vpop.f32.mrf.mxu0
    %v656 = vadd.f32 %v607, %v655
    %657 = vdwg.mxu0
    %v658 = vmax.f32 %v619, 0.0
    %v659 = vmax.f32 %v621, 0.0
    %v660 = vmax.f32 %v624, 0.0
    %v661 = vmax.f32 %v626, 0.0
    %v662 = vmax.f32 %v629, 0.0
    %v663 = vmax.f32 %v631, 0.0
    %v664 = vmax.f32 %v634, 0.0
    %v665 = vmax.f32 %v636, 0.0
    %v666 = vmax.f32 %v639, 0.0
    %v667 = vmax.f32 %v641, 0.0
    %v668 = vmax.f32 %v644, 0.0
    %v669 = vmax.f32 %v646, 0.0
    %v670 = vmax.f32 %v649, 0.0
    %v671 = vmax.f32 %v651, 0.0
    %v672 = vmax.f32 %v654, 0.0
    %v673 = vmax.f32 %v656, 0.0
    %v674 = vld [vmem:[%s4] sm:$0xff]
    %v675 = vld [vmem:[%s4 + $0x8] sm:$0xff]
    %v676 = vld [vmem:[%s4 + $0x10] sm:$0xff]
    %v677 = vld [vmem:[%s4 + $0x18] sm:$0xff]
    %v678 = vld [vmem:[%s4 + $0x20] sm:$0xff]
    %v679 = vld [vmem:[%s4 + $0x28] sm:$0xff]
    %v680 = vld [vmem:[%s4 + $0x30] sm:$0xff]
    %v681 = vld [vmem:[%s4 + $0x38] sm:$0xff]
    %v682 = vld [vmem:[%s4 + $0x40] sm:$0xff]
    %v683 = vld [vmem:[%s4 + $0x48] sm:$0xff]
    %v684 = vld [vmem:[%s4 + $0x50] sm:$0xff]
    %v685 = vld [vmem:[%s4 + $0x58] sm:$0xff]
    %v686 = vld [vmem:[%s4 + $0x60] sm:$0xff]
    %v687 = vld [vmem:[%s4 + $0x68] sm:$0xff]
    %v688 = vld [vmem:[%s4 + $0x70] sm:$0xff]
    %v689 = vld [vmem:[%s4 + $0x78] sm:$0xff]
    %690 = vmatpush.msra.mxu0 %v689
    %691 = vmatpush.msra.mxu0 %v688
    %692 = vmatpush.msra.mxu0 %v687
    %693 = vmatpush.msra.mxu0 %v686
    %694 = vmatpush.msra.mxu0 %v685
    %695 = vmatpush.msra.mxu0 %v684
    %696 = vmatpush.msra.mxu0 %v683
    %697 = vmatpush.msra.mxu0 %v682
    %698 = vmatpush.msra.mxu0 %v681
    %699 = vmatpush.msra.mxu0 %v680
    %700 = vmatpush.msra.mxu0 %v679
    %701 = vmatpush.msra.mxu0 %v678
    %702 = vmatpush.msra.mxu0 %v677
    %703 = vmatpush.msra.mxu0 %v676
    %704 = vmatpush.msra.mxu0 %v675
    %705 = vmatpush.msra.mxu0 %v674
    %706 = vmatmul.f32.gmra.mxu0 %v658
    %v707 = vpop.f32.mrf.mxu0
    %v708 = vadd.f32 0.0, %v707
    %709 = vmatmul.f32.gmra.mxu0 %v659
    %v710 = vpop.f32.mrf.mxu0
    %v711 = vadd.f32 0.0, %v710
    %712 = vmatmul.f32.gmra.mxu0 %v660
    %v713 = vpop.f32.mrf.mxu0
    %v714 = vadd.f32 0.0, %v713
    %715 = vmatmul.f32.gmra.mxu0 %v661
    %v716 = vpop.f32.mrf.mxu0
    %v717 = vadd.f32 0.0, %v716
    %718 = vmatmul.f32.gmra.mxu0 %v662
    %v719 = vpop.f32.mrf.mxu0
    %v720 = vadd.f32 0.0, %v719
    %721 = vmatmul.f32.gmra.mxu0 %v663
    %v722 = vpop.f32.mrf.mxu0
    %v723 = vadd.f32 0.0, %v722
    %724 = vmatmul.f32.gmra.mxu0 %v664
    %v725 = vpop.f32.mrf.mxu0
    %v726 = vadd.f32 0.0, %v725
    %727 = vmatmul.f32.gmra.mxu0 %v665
    %v728 = vpop.f32.mrf.mxu0
    %v729 = vadd.f32 0.0, %v728
    %730 = vmatmul.f32.gmra.mxu0 %v666
    %v731 = vpop.f32.mrf.mxu0
    %v732 = vadd.f32 0.0, %v731
    %733 = vmatmul.f32.gmra.mxu0 %v667
    %v734 = vpop.f32.mrf.mxu0
    %v735 = vadd.f32 0.0, %v734
    %736 = vmatmul.f32.gmra.mxu0 %v668
    %v737 = vpop.f32.mrf.mxu0
    %v738 = vadd.f32 0.0, %v737
    %739 = vmatmul.f32.gmra.mxu0 %v669
    %v740 = vpop.f32.mrf.mxu0
    %v741 = vadd.f32 0.0, %v740
    %742 = vmatmul.f32.gmra.mxu0 %v670
    %v743 = vpop.f32.mrf.mxu0
    %v744 = vadd.f32 0.0, %v743
    %745 = vmatmul.f32.gmra.mxu0 %v671
    %v746 = vpop.f32.mrf.mxu0
    %v747 = vadd.f32 0.0, %v746
    %748 = vmatmul.f32.gmra.mxu0 %v672
    %v749 = vpop.f32.mrf.mxu0
    %v750 = vadd.f32 0.0, %v749
    %751 = vmatmul.f32.gmra.mxu0 %v673
    %v752 = vpop.f32.mrf.mxu0
    %v753 = vadd.f32 0.0, %v752
    %754 = vdwg.mxu0
    %v755 = vld [vmem:[%s5] sm:$0x1]
    %772 = vrot.lane.b32.xlu0 %v708, 1
    %v773 = vpop.permute.xlu0 %772
    %774 = vrot.lane.b32.xlu0 %v711, 1
    %v775 = vpop.permute.xlu0 %774
    %776 = vrot.lane.b32.xlu0 %v714, 1
    %v777 = vpop.permute.xlu0 %776
    %778 = vrot.lane.b32.xlu0 %v717, 1
    %v779 = vpop.permute.xlu0 %778
    %780 = vrot.lane.b32.xlu0 %v720, 1
    %v781 = vpop.permute.xlu0 %780
    %782 = vrot.lane.b32.xlu0 %v723, 1
    %v783 = vpop.permute.xlu0 %782
    %784 = vrot.lane.b32.xlu0 %v726, 1
    %v785 = vpop.permute.xlu0 %784
    %786 = vrot.lane.b32.xlu0 %v729, 1
    %v787 = vpop.permute.xlu0 %786
    %788 = vrot.lane.b32.xlu0 %v732, 1
    %v789 = vpop.permute.xlu0 %788
    %790 = vrot.lane.b32.xlu0 %v735, 1
    %v791 = vpop.permute.xlu0 %790
    %792 = vrot.lane.b32.xlu0 %v738, 1
    %v793 = vpop.permute.xlu0 %792
    %794 = vrot.lane.b32.xlu0 %v741, 1
    %v795 = vpop.permute.xlu0 %794
    %796 = vrot.lane.b32.xlu0 %v744, 1
    %v797 = vpop.permute.xlu0 %796
    %798 = vrot.lane.b32.xlu0 %v747, 1
    %v799 = vpop.permute.xlu0 %798
    %800 = vrot.lane.b32.xlu0 %v750, 1
    %v801 = vpop.permute.xlu0 %800
    %802 = vrot.lane.b32.xlu0 %v753, 1
    %v803 = vpop.permute.xlu0 %802
    %820 = vxpose.xlu0.b32.start [1/16] %v773, 128
    %821 = vxpose.xlu0.b32.cont [2/16] %v775, 128
    %822 = vxpose.xlu0.b32.cont [3/16] %v777, 128
    %823 = vxpose.xlu0.b32.cont [4/16] %v779, 128
    %824 = vxpose.xlu0.b32.cont [5/16] %v781, 128
    %825 = vxpose.xlu0.b32.cont [6/16] %v783, 128
    %826 = vxpose.xlu0.b32.cont [7/16] %v785, 128
    %827 = vxpose.xlu0.b32.cont [8/16] %v787, 128
    %828 = vxpose.xlu0.b32.cont [9/16] %v789, 128
    %829 = vxpose.xlu0.b32.cont [10/16] %v791, 128
    %830 = vxpose.xlu0.b32.cont [11/16] %v793, 128
    %831 = vxpose.xlu0.b32.cont [12/16] %v795, 128
    %832 = vxpose.xlu0.b32.cont [13/16] %v797, 128
    %833 = vxpose.xlu0.b32.cont [14/16] %v799, 128
    %834 = vxpose.xlu0.b32.cont [15/16] %v801, 128
    %835 = vxpose.xlu0.b32.end [16/16] %v803, 128
    %v836 = vpop.trf.xlu0
    %v837 = vpop.trf.xlu0
    %v838 = vpop.trf.xlu0
    %v839 = vpop.trf.xlu0
    %v840 = vpop.trf.xlu0
    %v841 = vpop.trf.xlu0
    %v842 = vpop.trf.xlu0
    %v843 = vpop.trf.xlu0
    %v844 = vpop.trf.xlu0
    %v845 = vpop.trf.xlu0
    %v846 = vpop.trf.xlu0
    %v847 = vpop.trf.xlu0
    %v848 = vpop.trf.xlu0
    %v849 = vpop.trf.xlu0
    %v850 = vpop.trf.xlu0
    %v851 = vpop.trf.xlu0
    %852 = vset.pattern.permute.xlu0 126
    %853 = vperm.xlu0 %852, %v708
    %v854 = vpop.permute.xlu0 %853
    %856 = vset.pattern.permute.xlu0 126
    %857 = vperm.xlu0 %856, %v711
    %v858 = vpop.permute.xlu0 %857
    %860 = vset.pattern.permute.xlu0 126
    %861 = vperm.xlu0 %860, %v714
    %v862 = vpop.permute.xlu0 %861
    %864 = vset.pattern.permute.xlu0 126
    %865 = vperm.xlu0 %864, %v717
    %v866 = vpop.permute.xlu0 %865
    %868 = vset.pattern.permute.xlu0 126
    %869 = vperm.xlu0 %868, %v720
    %v870 = vpop.permute.xlu0 %869
    %872 = vset.pattern.permute.xlu0 126
    %873 = vperm.xlu0 %872, %v723
    %v874 = vpop.permute.xlu0 %873
    %876 = vset.pattern.permute.xlu0 126
    %877 = vperm.xlu0 %876, %v726
    %v878 = vpop.permute.xlu0 %877
    %880 = vset.pattern.permute.xlu0 126
    %881 = vperm.xlu0 %880, %v729
    %v882 = vpop.permute.xlu0 %881
    %884 = vset.pattern.permute.xlu0 126
    %885 = vperm.xlu0 %884, %v732
    %v886 = vpop.permute.xlu0 %885
    %888 = vset.pattern.permute.xlu0 126
    %889 = vperm.xlu0 %888, %v735
    %v890 = vpop.permute.xlu0 %889
    %892 = vset.pattern.permute.xlu0 126
    %893 = vperm.xlu0 %892, %v738
    %v894 = vpop.permute.xlu0 %893
    %896 = vset.pattern.permute.xlu0 126
    %897 = vperm.xlu0 %896, %v741
    %v898 = vpop.permute.xlu0 %897
    %900 = vset.pattern.permute.xlu0 126
    %901 = vperm.xlu0 %900, %v744
    %v902 = vpop.permute.xlu0 %901
    %904 = vset.pattern.permute.xlu0 126
    %905 = vperm.xlu0 %904, %v747
    %v906 = vpop.permute.xlu0 %905
    %908 = vset.pattern.permute.xlu0 126
    %909 = vperm.xlu0 %908, %v750
    %v910 = vpop.permute.xlu0 %909
    %912 = vset.pattern.permute.xlu0 126
    %913 = vperm.xlu0 %912, %v753
    %v914 = vpop.permute.xlu0 %913
    %v916 = vperm.slane %v836, 0
    %v917 = vadd.f32 %v854, %v916
    %v918 = vadd.f32 %v858, %v916
    %v919 = vadd.f32 %v862, %v916
    %v920 = vadd.f32 %v866, %v916
    %v921 = vadd.f32 %v870, %v916
    %v922 = vadd.f32 %v874, %v916
    %v923 = vadd.f32 %v878, %v916
    %v924 = vadd.f32 %v882, %v916
    %v925 = vadd.f32 %v886, %v916
    %v926 = vadd.f32 %v890, %v916
    %v927 = vadd.f32 %v894, %v916
    %v928 = vadd.f32 %v898, %v916
    %v929 = vadd.f32 %v902, %v916
    %v930 = vadd.f32 %v906, %v916
    %v931 = vadd.f32 %v910, %v916
    %v932 = vadd.f32 %v914, %v916
    %v933 = vmul.f32 %v917, 0.2
    %v934 = vmul.f32 %v918, 0.2
    %v935 = vmul.f32 %v919, 0.2
    %v936 = vmul.f32 %v920, 0.2
    %v937 = vmul.f32 %v921, 0.2
    %v938 = vmul.f32 %v922, 0.2
    %v939 = vmul.f32 %v923, 0.2
    %v940 = vmul.f32 %v924, 0.2
    %v941 = vmul.f32 %v925, 0.2
    %v942 = vmul.f32 %v926, 0.2
    %v943 = vmul.f32 %v927, 0.2
    %v944 = vmul.f32 %v928, 0.2
    %v945 = vmul.f32 %v929, 0.2
    %v946 = vmul.f32 %v930, 0.2
    %v947 = vmul.f32 %v931, 0.2
    %v948 = vmul.f32 %v932, 0.2
    %v949 = vmax.f32 %v917, %v933
    %v950 = vmax.f32 %v918, %v934
    %v951 = vmax.f32 %v919, %v935
    %v952 = vmax.f32 %v920, %v936
    %v953 = vmax.f32 %v921, %v937
    %v954 = vmax.f32 %v922, %v938
    %v955 = vmax.f32 %v923, %v939
    %v956 = vmax.f32 %v924, %v940
    %v957 = vmax.f32 %v925, %v941
    %v958 = vmax.f32 %v926, %v942
    %v959 = vmax.f32 %v927, %v943
    %v960 = vmax.f32 %v928, %v944
    %v961 = vmax.f32 %v929, %v945
    %v962 = vmax.f32 %v930, %v946
    %v963 = vmax.f32 %v931, %v947
    %v964 = vmax.f32 %v932, %v948
    %v965 = vsel %vm88, %v949, -1e+30
    %v966 = vsel %vm89, %v950, -1e+30
    %v967 = vsel %vm90, %v951, -1e+30
    %v968 = vsel %vm91, %v952, -1e+30
    %v969 = vsel %vm92, %v953, -1e+30
    %v970 = vsel %vm93, %v954, -1e+30
    %v971 = vsel %vm94, %v955, -1e+30
    %v972 = vsel %vm95, %v956, -1e+30
    %v973 = vsel %vm96, %v957, -1e+30
    %v974 = vsel %vm97, %v958, -1e+30
    %v975 = vsel %vm98, %v959, -1e+30
    %v976 = vsel %vm99, %v960, -1e+30
    %v977 = vsel %vm100, %v961, -1e+30
    %v978 = vsel %vm101, %v962, -1e+30
    %v979 = vsel %vm102, %v963, -1e+30
    %v980 = vsel %vm103, %v964, -1e+30
    %981 = vmax.xlane.f32.xlu0 %v965
    %v982 = vpop.xlane.xlu0 %981
    %983 = vmax.xlane.f32.xlu0 %v966
    %v984 = vpop.xlane.xlu0 %983
    %985 = vmax.xlane.f32.xlu0 %v967
    %v986 = vpop.xlane.xlu0 %985
    %987 = vmax.xlane.f32.xlu0 %v968
    %v988 = vpop.xlane.xlu0 %987
    %989 = vmax.xlane.f32.xlu0 %v969
    %v990 = vpop.xlane.xlu0 %989
    %991 = vmax.xlane.f32.xlu0 %v970
    %v992 = vpop.xlane.xlu0 %991
    %993 = vmax.xlane.f32.xlu0 %v971
    %v994 = vpop.xlane.xlu0 %993
    %995 = vmax.xlane.f32.xlu0 %v972
    %v996 = vpop.xlane.xlu0 %995
    %997 = vmax.xlane.f32.xlu0 %v973
    %v998 = vpop.xlane.xlu0 %997
    %999 = vmax.xlane.f32.xlu0 %v974
    %v1000 = vpop.xlane.xlu0 %999
    %1001 = vmax.xlane.f32.xlu0 %v975
    %v1002 = vpop.xlane.xlu0 %1001
    %1003 = vmax.xlane.f32.xlu0 %v976
    %v1004 = vpop.xlane.xlu0 %1003
    %1005 = vmax.xlane.f32.xlu0 %v977
    %v1006 = vpop.xlane.xlu0 %1005
    %1007 = vmax.xlane.f32.xlu0 %v978
    %v1008 = vpop.xlane.xlu0 %1007
    %1009 = vmax.xlane.f32.xlu0 %v979
    %v1010 = vpop.xlane.xlu0 %1009
    %1011 = vmax.xlane.f32.xlu0 %v980
    %v1012 = vpop.xlane.xlu0 %1011
    %v1013 = vsub.f32 %v965, %v982
    %v1014 = vsub.f32 %v966, %v984
    %v1015 = vsub.f32 %v967, %v986
    %v1016 = vsub.f32 %v968, %v988
    %v1017 = vsub.f32 %v969, %v990
    %v1018 = vsub.f32 %v970, %v992
    %v1019 = vsub.f32 %v971, %v994
    %v1020 = vsub.f32 %v972, %v996
    %v1021 = vsub.f32 %v973, %v998
    %v1022 = vsub.f32 %v974, %v1000
    %v1023 = vsub.f32 %v975, %v1002
    %v1024 = vsub.f32 %v976, %v1004
    %v1025 = vsub.f32 %v977, %v1006
    %v1026 = vsub.f32 %v978, %v1008
    %v1027 = vsub.f32 %v979, %v1010
    %v1028 = vsub.f32 %v980, %v1012
    %v1029 = vmul.f32 %v1013, 1.442695
    %v1030 = vpow.pop %v1029
    %v1031 = vmul.f32 %v1014, 1.442695
    %v1032 = vpow.pop %v1031
    %v1033 = vmul.f32 %v1015, 1.442695
    %v1034 = vpow.pop %v1033
    %v1035 = vmul.f32 %v1016, 1.442695
    %v1036 = vpow.pop %v1035
    %v1037 = vmul.f32 %v1017, 1.442695
    %v1038 = vpow.pop %v1037
    %v1039 = vmul.f32 %v1018, 1.442695
    %v1040 = vpow.pop %v1039
    %v1041 = vmul.f32 %v1019, 1.442695
    %v1042 = vpow.pop %v1041
    %v1043 = vmul.f32 %v1020, 1.442695
    %v1044 = vpow.pop %v1043
    %v1045 = vmul.f32 %v1021, 1.442695
    %v1046 = vpow.pop %v1045
    %v1047 = vmul.f32 %v1022, 1.442695
    %v1048 = vpow.pop %v1047
    %v1049 = vmul.f32 %v1023, 1.442695
    %v1050 = vpow.pop %v1049
    %v1051 = vmul.f32 %v1024, 1.442695
    %v1052 = vpow.pop %v1051
    %v1053 = vmul.f32 %v1025, 1.442695
    %v1054 = vpow.pop %v1053
    %v1055 = vmul.f32 %v1026, 1.442695
    %v1056 = vpow.pop %v1055
    %v1057 = vmul.f32 %v1027, 1.442695
    %v1058 = vpow.pop %v1057
    %v1059 = vmul.f32 %v1028, 1.442695
    %v1060 = vpow.pop %v1059
    %1061 = vadd.xlane.f32.xlu0 %v1030
    %v1062 = vpop.xlane.xlu0 %1061
    %1063 = vadd.xlane.f32.xlu0 %v1032
    %v1064 = vpop.xlane.xlu0 %1063
    %1065 = vadd.xlane.f32.xlu0 %v1034
    %v1066 = vpop.xlane.xlu0 %1065
    %1067 = vadd.xlane.f32.xlu0 %v1036
    %v1068 = vpop.xlane.xlu0 %1067
    %1069 = vadd.xlane.f32.xlu0 %v1038
    %v1070 = vpop.xlane.xlu0 %1069
    %1071 = vadd.xlane.f32.xlu0 %v1040
    %v1072 = vpop.xlane.xlu0 %1071
    %1073 = vadd.xlane.f32.xlu0 %v1042
    %v1074 = vpop.xlane.xlu0 %1073
    %1075 = vadd.xlane.f32.xlu0 %v1044
    %v1076 = vpop.xlane.xlu0 %1075
    %1077 = vadd.xlane.f32.xlu0 %v1046
    %v1078 = vpop.xlane.xlu0 %1077
    %1079 = vadd.xlane.f32.xlu0 %v1048
    %v1080 = vpop.xlane.xlu0 %1079
    %1081 = vadd.xlane.f32.xlu0 %v1050
    %v1082 = vpop.xlane.xlu0 %1081
    %1083 = vadd.xlane.f32.xlu0 %v1052
    %v1084 = vpop.xlane.xlu0 %1083
    %1085 = vadd.xlane.f32.xlu0 %v1054
    %v1086 = vpop.xlane.xlu0 %1085
    %1087 = vadd.xlane.f32.xlu0 %v1056
    %v1088 = vpop.xlane.xlu0 %1087
    %1089 = vadd.xlane.f32.xlu0 %v1058
    %v1090 = vpop.xlane.xlu0 %1089
    %1091 = vadd.xlane.f32.xlu0 %v1060
    %v1092 = vpop.xlane.xlu0 %1091
    %v1093 = vrcp.pop %v1062
    %v1094 = vrcp.pop %v1064
    %v1095 = vrcp.pop %v1066
    %v1096 = vrcp.pop %v1068
    %v1097 = vrcp.pop %v1070
    %v1098 = vrcp.pop %v1072
    %v1099 = vrcp.pop %v1074
    %v1100 = vrcp.pop %v1076
    %v1101 = vrcp.pop %v1078
    %v1102 = vrcp.pop %v1080
    %v1103 = vrcp.pop %v1082
    %v1104 = vrcp.pop %v1084
    %v1105 = vrcp.pop %v1086
    %v1106 = vrcp.pop %v1088
    %v1107 = vrcp.pop %v1090
    %v1108 = vrcp.pop %v1092
    %v1109 = vmul.f32 %v1030, %v1093
    %v1110 = vmul.f32 %v1032, %v1094
    %v1111 = vmul.f32 %v1034, %v1095
    %v1112 = vmul.f32 %v1036, %v1096
    %v1113 = vmul.f32 %v1038, %v1097
    %v1114 = vmul.f32 %v1040, %v1098
    %v1115 = vmul.f32 %v1042, %v1099
    %v1116 = vmul.f32 %v1044, %v1100
    %v1117 = vmul.f32 %v1046, %v1101
    %v1118 = vmul.f32 %v1048, %v1102
    %v1119 = vmul.f32 %v1050, %v1103
    %v1120 = vmul.f32 %v1052, %v1104
    %v1121 = vmul.f32 %v1054, %v1105
    %v1122 = vmul.f32 %v1056, %v1106
    %v1123 = vmul.f32 %v1058, %v1107
    %v1124 = vmul.f32 %v1060, %v1108
    %v1125 = vpack.c.bf16 %v1110, %v1109
    %v1126 = vpack.c.bf16 %v1112, %v1111
    %v1127 = vpack.c.bf16 %v1114, %v1113
    %v1128 = vpack.c.bf16 %v1116, %v1115
    %v1129 = vpack.c.bf16 %v1118, %v1117
    %v1130 = vpack.c.bf16 %v1120, %v1119
    %v1131 = vpack.c.bf16 %v1122, %v1121
    %v1132 = vpack.c.bf16 %v1124, %v1123
    %v1133 = vpack.c.bf16 %v711, %v708
    %v1134 = vpack.c.bf16 %v717, %v714
    %v1135 = vpack.c.bf16 %v723, %v720
    %v1136 = vpack.c.bf16 %v729, %v726
    %v1137 = vpack.c.bf16 %v735, %v732
    %v1138 = vpack.c.bf16 %v741, %v738
    %v1139 = vpack.c.bf16 %v747, %v744
    %v1140 = vpack.c.bf16 %v753, %v750
    %v1142 = vperm.slane %v755, 0
    %1144 = vmatpush.bf16.msra.mxu0 %v1140
    %1145 = vmatpush.bf16.msra.mxu0 %v1139
    %1146 = vmatpush.bf16.msra.mxu0 %v1138
    %1147 = vmatpush.bf16.msra.mxu0 %v1137
    %1148 = vmatpush.bf16.msra.mxu0 %v1136
    %1149 = vmatpush.bf16.msra.mxu0 %v1135
    %1150 = vmatpush.bf16.msra.mxu0 %v1134
    %1151 = vmatpush.bf16.msra.mxu0 %v1133
    %1152 = vmatmul.bf16.gmra.mxu0 %v1125
    %v1153 = vpop.f32.mrf.mxu0
    %v1154 = vadd.f32 %v1142, %v1153
    %v1155 = vpop.f32.mrf.mxu0
    %v1156 = vadd.f32 %v1142, %v1155
    %1157 = vmatmul.bf16.gmra.mxu0 %v1126
    %v1158 = vpop.f32.mrf.mxu0
    %v1159 = vadd.f32 %v1142, %v1158
    %v1160 = vpop.f32.mrf.mxu0
    %v1161 = vadd.f32 %v1142, %v1160
    %1162 = vmatmul.bf16.gmra.mxu0 %v1127
    %v1163 = vpop.f32.mrf.mxu0
    %v1164 = vadd.f32 %v1142, %v1163
    %v1165 = vpop.f32.mrf.mxu0
    %v1166 = vadd.f32 %v1142, %v1165
    %1167 = vmatmul.bf16.gmra.mxu0 %v1128
    %v1168 = vpop.f32.mrf.mxu0
    %v1169 = vadd.f32 %v1142, %v1168
    %v1170 = vpop.f32.mrf.mxu0
    %v1171 = vadd.f32 %v1142, %v1170
    %1172 = vmatmul.bf16.gmra.mxu0 %v1129
    %v1173 = vpop.f32.mrf.mxu0
    %v1174 = vadd.f32 %v1142, %v1173
    %v1175 = vpop.f32.mrf.mxu0
    %v1176 = vadd.f32 %v1142, %v1175
    %1177 = vmatmul.bf16.gmra.mxu0 %v1130
    %v1178 = vpop.f32.mrf.mxu0
    %v1179 = vadd.f32 %v1142, %v1178
    %v1180 = vpop.f32.mrf.mxu0
    %v1181 = vadd.f32 %v1142, %v1180
    %1182 = vmatmul.bf16.gmra.mxu0 %v1131
    %v1183 = vpop.f32.mrf.mxu0
    %v1184 = vadd.f32 %v1142, %v1183
    %v1185 = vpop.f32.mrf.mxu0
    %v1186 = vadd.f32 %v1142, %v1185
    %1187 = vmatmul.bf16.gmra.mxu0 %v1132
    %v1188 = vpop.f32.mrf.mxu0
    %v1189 = vadd.f32 %v1142, %v1188
    %v1190 = vpop.f32.mrf.mxu0
    %v1191 = vadd.f32 %v1142, %v1190
    %1192 = vdwg.mxu0
    %1193 = vst [vmem:[#allocation5] sm:$0xff] %v1154
    %1194 = vst [vmem:[#allocation5 + $0x8] sm:$0xff] %v1156
    %1195 = vst [vmem:[#allocation5 + $0x10] sm:$0xff] %v1159
    %1196 = vst [vmem:[#allocation5 + $0x18] sm:$0xff] %v1161
    %1197 = vst [vmem:[#allocation5 + $0x20] sm:$0xff] %v1164
    %1198 = vst [vmem:[#allocation5 + $0x28] sm:$0xff] %v1166
    %1199 = vst [vmem:[#allocation5 + $0x30] sm:$0xff] %v1169
    %1200 = vst [vmem:[#allocation5 + $0x38] sm:$0xff] %v1171
    %1201 = vst [vmem:[#allocation5 + $0x40] sm:$0xff] %v1174
    %1202 = vst [vmem:[#allocation5 + $0x48] sm:$0xff] %v1176
    %1203 = vst [vmem:[#allocation5 + $0x50] sm:$0xff] %v1179
    %1204 = vst [vmem:[#allocation5 + $0x58] sm:$0xff] %v1181
    %1205 = vst [vmem:[#allocation5 + $0x60] sm:$0xff] %v1184
    %1206 = vst [vmem:[#allocation5 + $0x68] sm:$0xff] %v1186
    %1207 = vst [vmem:[#allocation5 + $0x70] sm:$0xff] %v1189
    %1208 = vst [vmem:[#allocation5 + $0x78] sm:$0xff] %v1191
    // Predicated region
    $region30: #{tpu_custom_call.1} parent=1 // pred_check
      _
    $region31: #{tpu_custom_call.1} parent=1 // pred_check_branch
      %1210 = sbr.rel (0) target = $region33
    $region32: #{tpu_custom_call.1} parent=1 // pred_region
      %1212 = vsyncadd [#allocation4], 0
      %s1213 = sshll.u32 [#allocation5], 4
      %s1214 = int_to_ptr.vmem [resolvable:$true] %s1213
      %s1215 = sshll.u32 %s6, 4
      %s1216 = int_to_ptr.hbm [resolvable:$true] %s1215
      %1221 = dma.vmem_to_hbm [thread:$0]  %s1214, 2048, %s1216, [#allocation4], 128, 128, 8
    $region33: #{tpu_custom_call.1} parent=1 // pred_fallthru
      _
    // Predicated region
    $region34: #{tpu_custom_call.1} parent=1 // pred_check
      _
    $region35: #{tpu_custom_call.1} parent=1 // pred_check_branch
      %1223 = sbr.rel (0) target = $region37
    $region36: #{tpu_custom_call.1} parent=1 // pred_region
      %1225 = dma.done [#allocation4], 2048
    $region37: #{tpu_custom_call.1} parent=1 // pred_fallthru
      _
    %1226 = vsyncpa [#allocation3], 1
    %1227 = vsyncpa [#allocation4], 1

</llo_original>
